<compile_context>
chip_gen: v5e
topology: v5e:2x2
jax: 0.10.0
libtpu: 0.0.40
codegen_flags: <defaults>
</compile_context>

<pallas_src>
import functools

import jax
import jax.numpy as jnp
from jax.experimental import pallas as pl
from jax.experimental.pallas import tpu as pltpu

INPUT_SIZE = 2
HIDDEN_SIZE = 64
BATCH = 8


def gru_cell_kernel(xh_ref, h_ref, w_zn_ref, b_zn_ref, out_ref, *, hidden_size):
    """One fused dot: [x|h|0] @ [[W_iz|W_in];[W_hz|W_hn];0] + [b_z|b_n]."""
    xh = xh_ref[...].astype(jnp.float32)          # (B, Kpad)  Kpad = 128
    h = h_ref[...].astype(jnp.float32)            # (B, H)

    gates = jnp.dot(xh, w_zn_ref[...].astype(jnp.float32),
                    preferred_element_type=jnp.float32)  # (B, 2H) = 128 lanes
    gates = gates + b_zn_ref[...]                 # single broadcast add

    update_gate = jax.nn.sigmoid(gates[:, :hidden_size])    # z  (EUP)
    new_gate = jnp.tanh(gates[:, hidden_size:])              # n  (EUP)

    hy = (1.0 - update_gate) * h + update_gate * new_gate
    out_ref[...] = hy.astype(out_ref.dtype)


def _full_spec(shape):
    # Whole-array block resident in VMEM (no grid; all operands are tiny).
    return pl.BlockSpec(shape, lambda: (0,) * len(shape),
                        memory_space=pltpu.MemorySpace.VMEM)


@jax.jit
def custom_gru_cell(x, hx, params):
    """x: (B, input_size), hx: (B, hidden_size) -> hy: (B, hidden_size)."""
    B = x.shape[0]
    I = x.shape[1]
    H = params["W_hz"].shape[0]
    if hx is None:
        hx = jnp.zeros((B, H), x.dtype)

    # --- one-time operand fusion + alignment padding --------------------------
    # Columns: [z | n]; rows: [input rows ; hidden rows ; zero pad rows].
    K = I + H
    K_pad = ((K + 127) // 128) * 128              # pad contraction to 128-lane tile
    pad = K_pad - K

    w_i_zn = jnp.concatenate([params["W_iz"], params["W_in"]], axis=1)   # (I, 2H)
    w_h_zn = jnp.concatenate([params["W_hz"], params["W_hn"]], axis=1)   # (H, 2H)
    w_zn = jnp.concatenate(
        [w_i_zn, w_h_zn, jnp.zeros((pad, 2 * H), w_i_zn.dtype)], axis=0)  # (Kpad, 2H)
    b_zn = jnp.concatenate([params["b_iz"] + params["b_hz"],
                            params["b_in"] + params["b_hn"]]).reshape(1, 2 * H)
    xh = jnp.concatenate(
        [x, hx.astype(x.dtype), jnp.zeros((B, pad), x.dtype)], axis=1)    # (B, Kpad)

    kernel = functools.partial(gru_cell_kernel, hidden_size=H)
    args = (xh, hx, w_zn, b_zn)

    return pl.pallas_call(
        kernel,
        out_shape=jax.ShapeDtypeStruct((B, H), x.dtype),
        in_specs=[_full_spec(a.shape) for a in args],
        out_specs=_full_spec((B, H)),
    )(*args)


def init_params(key, input_size, hidden_size, dtype=jnp.float32):
    # Full parameter set kept for checkpoint/pytree compatibility with the
    # PyTorch module; W_ir/W_hr/b_ir/b_hr are dead in the forward and unused
    # by the kernel.
    std = 1.0 / jnp.sqrt(jnp.asarray(hidden_size, jnp.float32))
    shapes = {
        "W_ir": (input_size, hidden_size), "W_hr": (hidden_size, hidden_size),
        "b_ir": (hidden_size,), "b_hr": (hidden_size,),
        "W_iz": (input_size, hidden_size), "W_hz": (hidden_size, hidden_size),
        "b_iz": (hidden_size,), "b_hz": (hidden_size,),
        "W_in": (input_size, hidden_size), "W_hn": (hidden_size, hidden_size),
        "b_in": (hidden_size,), "b_hn": (hidden_size,),
    }
    params = {}
    keys = jax.random.split(key, len(shapes))
    for k, (name, shape) in zip(keys, shapes.items()):
        params[name] = jax.random.uniform(k, shape, dtype, -std, std)
    return params


def reference_gru_cell(x, hx, p):
    """Pure-JAX reference mirroring the PyTorch forward exactly."""
    gates_r = x @ p["W_ir"] + hx @ p["W_hr"] + p["b_ir"] + p["b_hr"]
    gates_z = x @ p["W_iz"] + hx @ p["W_hz"] + p["b_iz"] + p["b_hz"]
    gates_n = x @ p["W_in"] + hx @ p["W_hn"] + p["b_in"] + p["b_hn"]
    _ = jax.nn.sigmoid(gates_r)            # reset gate computed, never used
    z = jax.nn.sigmoid(gates_z)
    n = jnp.tanh(gates_n)
    return (1.0 - z) * hx + z * n


if __name__ == "__main__":
    key = jax.random.PRNGKey(0)
    k_params, k_x, k_h = jax.random.split(key, 3)

    params = init_params(k_params, INPUT_SIZE, HIDDEN_SIZE)
    x = jax.random.normal(k_x, (BATCH, INPUT_SIZE), jnp.float32)
    hx = jax.random.normal(k_h, (BATCH, HIDDEN_SIZE), jnp.float32)

    hy = custom_gru_cell(x, hx, params)
    hy = jax.block_until_ready(hy)

    hy_ref = reference_gru_cell(x, hx, params)
    assert hy.shape == (BATCH, HIDDEN_SIZE)
    assert jnp.allclose(hy, hy_ref, atol=1e-5, rtol=1e-5)

    print("KERNEL_OK")
</pallas_src>

<mosaic_0001>
module attributes {stable_mosaic.version = 11 : i64} {
  func.func @gru_cell_kernel(%arg0: memref<8x128xf32, #tpu.memory_space<vmem>>, %arg1: memref<8x64xf32, #tpu.memory_space<vmem>>, %arg2: memref<128x128xf32, #tpu.memory_space<vmem>>, %arg3: memref<1x128xf32, #tpu.memory_space<vmem>>, %arg4: memref<8x64xf32, #tpu.memory_space<vmem>>) attributes {dimension_semantics = [], scalar_prefetch = 0 : i64, scratch_operands = 0 : i64, tpu.core_type = #tpu.core_type<tc>} {
    %c0 = arith.constant 0 : index
    %c0_0 = arith.constant 0 : index
    %0 = vector.load %arg0[%c0, %c0_0] : memref<8x128xf32, #tpu.memory_space<vmem>>, vector<8x128xf32>
    %c0_1 = arith.constant 0 : index
    %c0_2 = arith.constant 0 : index
    %1 = vector.load %arg1[%c0_1, %c0_2] : memref<8x64xf32, #tpu.memory_space<vmem>>, vector<8x64xf32>
    %c0_3 = arith.constant 0 : index
    %c0_4 = arith.constant 0 : index
    %2 = vector.load %arg2[%c0_3, %c0_4] : memref<128x128xf32, #tpu.memory_space<vmem>>, vector<128x128xf32>
    %cst = arith.constant dense<0.000000e+00> : vector<8x128xf32>
    %3 = tpu.matmul %0, %2, %cst {dimension_numbers = #tpu.dot_dimension_numbers<[1], [0], [0], [1], [0, 0, 1, 1], [], []>} : vector<8x128xf32>, vector<128x128xf32>, vector<8x128xf32> -> vector<8x128xf32>
    %c0_5 = arith.constant 0 : index
    %c0_6 = arith.constant 0 : index
    %4 = vector.load %arg3[%c0_5, %c0_6] : memref<1x128xf32, #tpu.memory_space<vmem>>, vector<1x128xf32>
    %5 = vector.broadcast %4 : vector<1x128xf32> to vector<8x128xf32>
    %6 = arith.addf %3, %5 : vector<8x128xf32>
    %7 = vector.extract_strided_slice %6 {offsets = [0, 0], sizes = [8, 64], strides = [1, 1]} : vector<8x128xf32> to vector<8x64xf32>
    %8 = arith.negf %7 : vector<8x64xf32>
    %9 = math.exp %8 : vector<8x64xf32>
    %cst_7 = arith.constant 1.000000e+00 : f32
    %10 = vector.broadcast %cst_7 : f32 to vector<8x64xf32>
    %11 = arith.addf %10, %9 : vector<8x64xf32>
    %12 = arith.divf %10, %11 : vector<8x64xf32>
    %13 = vector.extract_strided_slice %6 {offsets = [0, 64], sizes = [8, 64], strides = [1, 1]} : vector<8x128xf32> to vector<8x64xf32>
    %14 = math.tanh %13 : vector<8x64xf32>
    %cst_8 = arith.constant 1.000000e+00 : f32
    %15 = vector.broadcast %cst_8 : f32 to vector<8x64xf32>
    %16 = arith.subf %15, %12 : vector<8x64xf32>
    %17 = arith.mulf %16, %1 : vector<8x64xf32>
    %18 = arith.mulf %12, %14 : vector<8x64xf32>
    %19 = arith.addf %17, %18 : vector<8x64xf32>
    %c0_9 = arith.constant 0 : index
    %c0_10 = arith.constant 0 : index
    %20 = vector.load %arg4[%c0_9, %c0_10] : memref<8x64xf32, #tpu.memory_space<vmem>>, vector<8x64xf32>
    tpu.vector_store %arg4[%c0_9, %c0_10], %19 {strides = array<i32>} : memref<8x64xf32, #tpu.memory_space<vmem>>, vector<8x64xf32>,
    return
  }
}

</mosaic_0001>

<llo_original>
// kernel: custom_gru_cell.1
$region0: #{custom_gru_cell.1}
  #allocation0 [shape = 'u32[]', space=smem, size = 0x4, offset = 0x4, fixed_abs, tag = 'smem constant byte address 0x4 - core index']
  #allocation1 [shape = 'u32[72,128]{1,0:T(1,128)}', space=vmem, size = 0x9000, scoped, tag = 'internal scratch']
  %s0 = inlined_call_operand.vmem [shape: f32[8,128], index: 0, kind: input, shape index: {}]
  %s1 = inlined_call_operand.vmem [shape: f32[8,64], index: 1, kind: input, shape index: {}]
  %s2 = inlined_call_operand.vmem [shape: f32[128,128], index: 2, kind: input, shape index: {}]
  %s3 = inlined_call_operand.vmem [shape: f32[1,128], index: 3, kind: input, shape index: {}]
  %s4 = inlined_call_operand.hbm [shape: f32[8,64], index: 4, kind: output, shape index: {}]
  %s5 = sld [smem:[#allocation0]]
  $region26: #{custom_gru_cell.1} parent=0
    _
  %s7 = ssub.s32 1, %s5
  %s8 = scalar_select 0, %s7, %s5
  $region1: #{custom_gru_cell.1} parent=0
    #allocation2 [shape = 'u8[4096]{0}', space=vmem, size = 0x1000, scoped, tag = 'output window, operand 0, single buffered']
    #allocation3 [shape = 's32[1]{0}', space=sflag, size = 0x4, scoped, tag = 'scoped memory for custom_gru_cell.1']
    %9 = vsyncpa [#allocation3], 0
    // Predicated region
    $region2: #{custom_gru_cell.1} parent=1 // pred_check
      _
    $region3: #{custom_gru_cell.1} parent=1 // pred_check_branch
      %11 = sbr.rel (0) target = $region5
    $region4: #{custom_gru_cell.1} parent=1 // pred_region
      _
    $region5: #{custom_gru_cell.1} parent=1 // pred_fallthru
      _
    // Predicated region
    $region6: #{custom_gru_cell.1} parent=1 // pred_check
      _
    $region7: #{custom_gru_cell.1} parent=1 // pred_check_branch
      %13 = sbr.rel (0) target = $region9
    $region8: #{custom_gru_cell.1} parent=1 // pred_region
      _
    $region9: #{custom_gru_cell.1} parent=1 // pred_fallthru
      _
    // Predicated region
    $region10: #{custom_gru_cell.1} parent=1 // pred_check
      _
    $region11: #{custom_gru_cell.1} parent=1 // pred_check_branch
      %15 = sbr.rel (0) target = $region13
    $region12: #{custom_gru_cell.1} parent=1 // pred_region
      _
    $region13: #{custom_gru_cell.1} parent=1 // pred_fallthru
      _
    // Predicated region
    $region14: #{custom_gru_cell.1} parent=1 // pred_check
      _
    $region15: #{custom_gru_cell.1} parent=1 // pred_check_branch
      %17 = sbr.rel (0) target = $region17
    $region16: #{custom_gru_cell.1} parent=1 // pred_region
      _
    $region17: #{custom_gru_cell.1} parent=1 // pred_fallthru
      _
    %v18 = vld [vmem:[%s0] sm:$0xff]
    %v19 = vld [vmem:[%s1] sm:$0xff]
    %v20 = vld [vmem:[%s2] sm:$0xff]
    %v21 = vld [vmem:[%s2 + $0x8] sm:$0xff]
    %v22 = vld [vmem:[%s2 + $0x10] sm:$0xff]
    %v23 = vld [vmem:[%s2 + $0x18] sm:$0xff]
    %v24 = vld [vmem:[%s2 + $0x20] sm:$0xff]
    %v25 = vld [vmem:[%s2 + $0x28] sm:$0xff]
    %v26 = vld [vmem:[%s2 + $0x30] sm:$0xff]
    %v27 = vld [vmem:[%s2 + $0x38] sm:$0xff]
    %v28 = vld [vmem:[%s2 + $0x40] sm:$0xff]
    %v29 = vld [vmem:[%s2 + $0x48] sm:$0xff]
    %v30 = vld [vmem:[%s2 + $0x50] sm:$0xff]
    %v31 = vld [vmem:[%s2 + $0x58] sm:$0xff]
    %v32 = vld [vmem:[%s2 + $0x60] sm:$0xff]
    %v33 = vld [vmem:[%s2 + $0x68] sm:$0xff]
    %v34 = vld [vmem:[%s2 + $0x70] sm:$0xff]
    %v35 = vld [vmem:[%s2 + $0x78] sm:$0xff]
    %v36 = vld [vmem:[%s3] sm:$0x1]
    %v38 = vperm.slane %v36, 0
    %40 = vmatpush.msra.mxu0 %v35
    %41 = vmatpush.msra.mxu0 %v34
    %42 = vmatpush.msra.mxu0 %v33
    %43 = vmatpush.msra.mxu0 %v32
    %44 = vmatpush.msra.mxu0 %v31
    %45 = vmatpush.msra.mxu0 %v30
    %46 = vmatpush.msra.mxu0 %v29
    %47 = vmatpush.msra.mxu0 %v28
    %48 = vmatpush.msra.mxu0 %v27
    %49 = vmatpush.msra.mxu0 %v26
    %50 = vmatpush.msra.mxu0 %v25
    %51 = vmatpush.msra.mxu0 %v24
    %52 = vmatpush.msra.mxu0 %v23
    %53 = vmatpush.msra.mxu0 %v22
    %54 = vmatpush.msra.mxu0 %v21
    %55 = vmatpush.msra.mxu0 %v20
    %56 = vmatmul.f32.gmra.mxu0 %v18
    %v57 = vpop.f32.mrf.mxu0
    %v58 = vadd.f32 %v38, %v57
    %59 = vdwg.mxu0
    %v60 = vxor.u32 %v58, 2147483648
    %v61 = vmul.f32 %v60, 1.442695
    %v62 = vpow.pop %v61
    %v63 = vadd.f32 %v62, 1.0
    %v64 = vrcp.pop %v63
    %v65 = vmul.f32 %v63, %v64
    %v66 = vsub.f32 1.0, %v65
    %v67 = vmul.f32 %v64, %v66
    %v68 = vadd.f32 %v64, %v67
    %vm69 = vweird.f32 %v63
    %vm70 = vweird.f32 %v64
    %vm71 = vmor %vm69, %vm70
    %v72 = vsel %vm71, %v64, %v68
    %v73 = vand.u32 2147483647, %v63
    %vm74 = vcmp.eq.f32.partialorder %v73, 8.507059e+37
    %v75 = vand.u32 %v63, 2147483648
    %v76 = vor.u32 1.1754944e-38, %v75
    %v77 = vsel %vm74, %v76, %v72
    %v78 = vmul.f32 1.0, %v77
    %v79 = vtanh.pop %v58
    %v80 = vsub.f32 1.0, %v78
    %v81 = vmul.f32 %v80, %v19
    %83 = vrot.lane.b32.xlu0 %v79, 64
    %v84 = vpop.permute.xlu0 %83
    %v86 = vmul.f32 %v78, %v84
    %v87 = vadd.f32 %v81, %v86
    %vm88 = vcmask 523264
    %89 = vst.msk [vmem:[#allocation2] sm:$0xff] %vm88, %v87
    // Predicated region
    $region18: #{custom_gru_cell.1} parent=1 // pred_check
      _
    $region19: #{custom_gru_cell.1} parent=1 // pred_check_branch
      %91 = sbr.rel (0) target = $region21
    $region20: #{custom_gru_cell.1} parent=1 // pred_region
      %93 = vsyncadd [#allocation3], 0
      %s95 = sshll.u32 [#allocation2], 4
      %s96 = int_to_ptr.vmem [resolvable:$true] %s95
      %s97 = sshll.u32 %s4, 4
      %s98 = int_to_ptr.hbm [resolvable:$true] %s97
      %100 = dma.vmem_to_hbm [thread:$0]  %s96, 128, %s98, [#allocation3]
    $region21: #{custom_gru_cell.1} parent=1 // pred_fallthru
      _
    // Predicated region
    $region22: #{custom_gru_cell.1} parent=1 // pred_check
      _
    $region23: #{custom_gru_cell.1} parent=1 // pred_check_branch
      %102 = sbr.rel (0) target = $region25
    $region24: #{custom_gru_cell.1} parent=1 // pred_region
      %104 = dma.done [#allocation3], 128
    $region25: #{custom_gru_cell.1} parent=1 // pred_fallthru
      _
    %105 = vsyncpa [#allocation3], 1

</llo_original>
